<compile_context>
chip_gen: v7x
topology: tpu7x:2x2x1
jax: 0.10.0
libtpu: 0.0.40
codegen_flags: <defaults>
</compile_context>

<pallas_src>
import jax
import jax.numpy as jnp
from jax.experimental import pallas as pl
from jax.experimental.pallas import tpu as pltpu

D_MODEL = 764      # hidden size implied by fc1 = nn.Linear(764, 256)
H1 = 256
H2 = 64
H2_PAD = 128       # lane-dense fc2 output / fc3 contraction
OUT = 4
OUT_PAD = 128      # lane-dense output tile; sliced back to 4 in the wrapper
VOCAB = 100        # stand-in vocab size
VOCAB_PAD = 128    # padded vocab for the one-hot gather matmul


def _albert_fused_kernel(ids_ref, mask_ref, ew1_ref, b1_ref,
                         w2_ref, b2_ref, w3_ref, b3_ref, o_ref):
    # ids_ref / mask_ref: (tm, 1) per-row token id / attention mask.
    tm = ids_ref.shape[0]
    ids = ids_ref[...]                                             # (tm, 1) int32
    keep = mask_ref[...] != 0                                      # (tm, 1) bool
    iota = jax.lax.broadcasted_iota(jnp.int32, (tm, VOCAB_PAD), 1)
    # Mask folded into the one-hot: masked rows become all-zero -> h1 = relu(b1),
    # exactly matching x = 0 after the (bert_output * mask) of the reference.
    # NOTE: ids outside [0, VOCAB) also yield all-zero rows (zero embedding).
    one_hot = ((iota == ids) & keep).astype(jnp.bfloat16)          # (tm, 128)

    # Fused embedding-gather + fc1 on the MXU: one_hot @ (E @ W1)  (EW1 fold).
    h = jnp.dot(one_hot, ew1_ref[...], preferred_element_type=jnp.float32)
    h = jnp.maximum(h + b1_ref[...], 0.0)                          # fc1 + ReLU (f32)

    h = jnp.dot(h.astype(jnp.bfloat16), w2_ref[...],
                preferred_element_type=jnp.float32)
    h = jnp.maximum(h + b2_ref[...], 0.0)                          # fc2 + ReLU (f32)

    y = jnp.dot(h.astype(jnp.bfloat16), w3_ref[...],
                preferred_element_type=jnp.float32)
    o_ref[...] = (y + b3_ref[...]).astype(o_ref.dtype)             # out (bf16 store)


def prepare_albert_params(emb_table, head_params):
    """One-time weight prep: EW1 fold + zero-padding + bf16 cast (hoisted out of
    the per-call forward)."""
    w1, b1, w2, b2, w3, b3 = head_params

    # EW1 = E @ W1, exact fold of the embedding lookup and fc1 (vocab padded 100->128).
    ew1 = jnp.dot(emb_table, w1)                                   # (100, 256) f32
    ew1_p = (jnp.zeros((VOCAB_PAD, H1), jnp.float32)
             .at[:VOCAB, :].set(ew1).astype(jnp.bfloat16))

    # H2 padded 64 -> 128: zero cols of W2/b2 and zero rows of W3 (exact through ReLU).
    w2_p = (jnp.zeros((H1, H2_PAD), jnp.float32)
            .at[:, :H2].set(w2).astype(jnp.bfloat16))
    b2_p = jnp.zeros((1, H2_PAD), jnp.float32).at[:, :H2].set(b2)
    w3_p = (jnp.zeros((H2_PAD, OUT_PAD), jnp.float32)
            .at[:H2, :OUT].set(w3).astype(jnp.bfloat16))
    b3_p = jnp.zeros((1, OUT_PAD), jnp.float32).at[:, :OUT].set(b3)

    return ew1_p, b1, w2_p, b2_p, w3_p, b3_p


def _choose_tm(M, tm):
    """Pick the effective row tile: multiple of 128, no over-padding of small M,
    and >= 2 grid steps when possible (so both v7x TensorCores get work)."""
    tm = max(128, (tm // 128) * 128)
    m_up = pl.cdiv(M, 128) * 128
    tm = min(tm, m_up)
    if m_up >= 256 and pl.cdiv(m_up, tm) < 2:
        tm = max(128, ((m_up // 2) // 128) * 128)
    return tm


def albert_forward(inp, inp_mask, prepared_params, *, tm=512):
    """inp, inp_mask: (B, S) -> (B, S, 4). `prepared_params` from prepare_albert_params."""
    B, S = inp.shape
    M = B * S
    tm = _choose_tm(M, tm)
    M_pad = pl.cdiv(M, tm) * tm

    ids = inp.reshape(M, 1).astype(jnp.int32)
    mask = inp_mask.reshape(M, 1).astype(jnp.int32)
    if M_pad != M:
        # Padded rows get id 0 / mask 0 -> all-zero one-hot; sliced off below.
        ids = jnp.pad(ids, ((0, M_pad - M), (0, 0)))
        mask = jnp.pad(mask, ((0, M_pad - M), (0, 0)))

    ew1_p, b1, w2_p, b2_p, w3_p, b3_p = prepared_params

    grid = (M_pad // tm,)
    y = pl.pallas_call(
        _albert_fused_kernel,
        out_shape=jax.ShapeDtypeStruct((M_pad, OUT_PAD), jnp.bfloat16),
        grid_spec=pltpu.PrefetchScalarGridSpec(
            num_scalar_prefetch=0,
            grid=grid,
            in_specs=[
                pl.BlockSpec((tm, 1), lambda i: (i, 0)),               # token ids
                pl.BlockSpec((tm, 1), lambda i: (i, 0)),               # mask
                pl.BlockSpec((VOCAB_PAD, H1), lambda i: (0, 0)),       # EW1 (resident)
                pl.BlockSpec((1, H1), lambda i: (0, 0)),               # b1
                pl.BlockSpec((H1, H2_PAD), lambda i: (0, 0)),          # w2
                pl.BlockSpec((1, H2_PAD), lambda i: (0, 0)),           # b2
                pl.BlockSpec((H2_PAD, OUT_PAD), lambda i: (0, 0)),     # w3
                pl.BlockSpec((1, OUT_PAD), lambda i: (0, 0)),          # b3
            ],
            out_specs=pl.BlockSpec((tm, OUT_PAD), lambda i: (i, 0)),
        ),
        compiler_params=pltpu.CompilerParams(
            dimension_semantics=("parallel",)),
    )(ids, mask, ew1_p, b1, w2_p, b2_p, w3_p, b3_p)

    return y[:M, :OUT].astype(jnp.float32).reshape(B, S, OUT)


def init_params(key):
    ks = jax.random.split(key, 4)

    def xavier(k, fan_in, fan_out):
        limit = jnp.sqrt(6.0 / (fan_in + fan_out))
        return jax.random.uniform(k, (fan_in, fan_out), jnp.float32, -limit, limit)

    emb_table = jax.random.normal(ks[0], (VOCAB, D_MODEL), jnp.float32) * 0.02
    w1 = xavier(ks[1], D_MODEL, H1)
    b1 = jnp.zeros((1, H1), jnp.float32)
    w2 = xavier(ks[2], H1, H2)
    b2 = jnp.zeros((1, H2), jnp.float32)
    w3 = xavier(ks[3], H2, OUT)
    b3 = jnp.zeros((1, OUT), jnp.float32)
    # (self.dense is defined in __init__ but never used in forward; omitted.)
    return emb_table, (w1, b1, w2, b2, w3, b3)


def reference_forward(inp, inp_mask, emb_table, head_params):
    """Pure-JAX reference following the kernel's numerical recipe:
    EW1 fold rounded to bf16, bf16 MXU matmuls with f32 accumulation, bf16 output."""
    w1, b1, w2, b2, w3, b3 = head_params
    ew1 = jnp.dot(emb_table, w1).astype(jnp.bfloat16).astype(jnp.float32)  # (100, 256)
    mask = (inp_mask != 0).astype(jnp.float32)[..., None]
    h = jnp.maximum(ew1[inp] * mask + b1, 0.0)          # stand-in bert -> fc1 -> ReLU

    def mm(a, w):
        return jnp.dot(a.astype(jnp.bfloat16), w.astype(jnp.bfloat16),
                       preferred_element_type=jnp.float32)

    h = jnp.maximum(mm(h, w2) + b2, 0.0)
    y = mm(h, w3) + b3
    return y.astype(jnp.bfloat16).astype(jnp.float32)


if __name__ == "__main__":
    key = jax.random.PRNGKey(0)
    k_inp, k_param = jax.random.split(key)

    B, S = 2, 8
    inp = jax.random.randint(k_inp, (B, S), 0, VOCAB, dtype=jnp.int32)
    inp_mask = jnp.ones((B, S), jnp.int32).at[:, -2:].set(0)   # exercise masking

    emb_table, head_params = init_params(k_param)
    prepared = prepare_albert_params(emb_table, head_params)   # one-time weight prep

    out = albert_forward(inp, inp_mask, prepared)
    out = jax.block_until_ready(out)

    ref = reference_forward(inp, inp_mask, emb_table, head_params)
    assert out.shape == (B, S, OUT), out.shape
    assert jnp.allclose(out, ref, atol=1e-3, rtol=1e-3), "mismatch vs reference"

    print("KERNEL_OK")
</pallas_src>

<mosaic_0001>
module attributes {stable_mosaic.version = 11 : i64} {
  func.func @_albert_fused_kernel(%arg0: i32, %arg1: memref<128x1xi32, #tpu.memory_space<vmem>>, %arg2: memref<128x1xi32, #tpu.memory_space<vmem>>, %arg3: memref<128x256xbf16, #tpu.memory_space<vmem>>, %arg4: memref<1x256xf32, #tpu.memory_space<vmem>>, %arg5: memref<256x128xbf16, #tpu.memory_space<vmem>>, %arg6: memref<1x128xf32, #tpu.memory_space<vmem>>, %arg7: memref<128x128xbf16, #tpu.memory_space<vmem>>, %arg8: memref<1x128xf32, #tpu.memory_space<vmem>>, %arg9: memref<128x128xbf16, #tpu.memory_space<vmem>>) attributes {dimension_semantics = [#tpu.dimension_semantics<parallel>], iteration_bounds = array<i64: 1>, scalar_prefetch = 0 : i64, scratch_operands = 0 : i64, tpu.core_type = #tpu.core_type<tc>, window_params = [{transform_indices = @transform_0, window_bounds = array<i64: 128, 1>}, {transform_indices = @transform_1, window_bounds = array<i64: 128, 1>}, {pipeline_mode = #tpu.pipeline_mode<synchronous>, transform_indices = @transform_2, window_bounds = array<i64: 128, 256>}, {pipeline_mode = #tpu.pipeline_mode<synchronous>, transform_indices = @transform_3, window_bounds = array<i64: 1, 256>}, {pipeline_mode = #tpu.pipeline_mode<synchronous>, transform_indices = @transform_4, window_bounds = array<i64: 256, 128>}, {pipeline_mode = #tpu.pipeline_mode<synchronous>, transform_indices = @transform_5, window_bounds = array<i64: 1, 128>}, {pipeline_mode = #tpu.pipeline_mode<synchronous>, transform_indices = @transform_6, window_bounds = array<i64: 128, 128>}, {pipeline_mode = #tpu.pipeline_mode<synchronous>, transform_indices = @transform_7, window_bounds = array<i64: 1, 128>}, {transform_indices = @transform_8, window_bounds = array<i64: 128, 128>}]} {
    %c0 = arith.constant 0 : index
    %c0_0 = arith.constant 0 : index
    %0 = vector.load %arg1[%c0, %c0_0] : memref<128x1xi32, #tpu.memory_space<vmem>>, vector<128x1xi32>
    %c0_1 = arith.constant 0 : index
    %c0_2 = arith.constant 0 : index
    %1 = vector.load %arg2[%c0_1, %c0_2] : memref<128x1xi32, #tpu.memory_space<vmem>>, vector<128x1xi32>
    %c0_i32 = arith.constant 0 : i32
    %2 = vector.broadcast %c0_i32 : i32 to vector<128x1xi32>
    %3 = arith.cmpi ne, %1, %2 : vector<128x1xi32>
    %4 = tpu.iota {dimensions = array<i32: 1>} : vector<128x128xi32>
    %5 = vector.broadcast %0 : vector<128x1xi32> to vector<128x128xi32>
    %6 = arith.cmpi eq, %4, %5 : vector<128x128xi32>
    %7 = vector.broadcast %3 : vector<128x1xi1> to vector<128x128xi1>
    %8 = arith.andi %6, %7 : vector<128x128xi1>
    %9 = arith.extui %8 : vector<128x128xi1> to vector<128x128xi32>
    %10 = arith.sitofp %9 : vector<128x128xi32> to vector<128x128xf32>
    %11 = arith.truncf %10 : vector<128x128xf32> to vector<128x128xbf16>
    %c0_3 = arith.constant 0 : index
    %c0_4 = arith.constant 0 : index
    %12 = vector.load %arg3[%c0_3, %c0_4] : memref<128x256xbf16, #tpu.memory_space<vmem>>, vector<128x256xbf16>
    %cst = arith.constant dense<0.000000e+00> : vector<128x256xf32>
    %13 = tpu.matmul %11, %12, %cst {dimension_numbers = #tpu.dot_dimension_numbers<[1], [0], [0], [1], [0, 0, 1, 1], [], []>} : vector<128x128xbf16>, vector<128x256xbf16>, vector<128x256xf32> -> vector<128x256xf32>
    %c0_5 = arith.constant 0 : index
    %c0_6 = arith.constant 0 : index
    %14 = vector.load %arg4[%c0_5, %c0_6] : memref<1x256xf32, #tpu.memory_space<vmem>>, vector<1x256xf32>
    %15 = vector.broadcast %14 : vector<1x256xf32> to vector<128x256xf32>
    %16 = arith.addf %13, %15 : vector<128x256xf32>
    %cst_7 = arith.constant 0.000000e+00 : f32
    %17 = vector.broadcast %cst_7 : f32 to vector<128x256xf32>
    %18 = arith.maximumf %16, %17 : vector<128x256xf32>
    %19 = arith.truncf %18 : vector<128x256xf32> to vector<128x256xbf16>
    %c0_8 = arith.constant 0 : index
    %c0_9 = arith.constant 0 : index
    %20 = vector.load %arg5[%c0_8, %c0_9] : memref<256x128xbf16, #tpu.memory_space<vmem>>, vector<256x128xbf16>
    %cst_10 = arith.constant dense<0.000000e+00> : vector<128x128xf32>
    %21 = tpu.matmul %19, %20, %cst_10 {dimension_numbers = #tpu.dot_dimension_numbers<[1], [0], [0], [1], [0, 0, 1, 1], [], []>} : vector<128x256xbf16>, vector<256x128xbf16>, vector<128x128xf32> -> vector<128x128xf32>
    %c0_11 = arith.constant 0 : index
    %c0_12 = arith.constant 0 : index
    %22 = vector.load %arg6[%c0_11, %c0_12] : memref<1x128xf32, #tpu.memory_space<vmem>>, vector<1x128xf32>
    %23 = vector.broadcast %22 : vector<1x128xf32> to vector<128x128xf32>
    %24 = arith.addf %21, %23 : vector<128x128xf32>
    %cst_13 = arith.constant 0.000000e+00 : f32
    %25 = vector.broadcast %cst_13 : f32 to vector<128x128xf32>
    %26 = arith.maximumf %24, %25 : vector<128x128xf32>
    %27 = arith.truncf %26 : vector<128x128xf32> to vector<128x128xbf16>
    %c0_14 = arith.constant 0 : index
    %c0_15 = arith.constant 0 : index
    %28 = vector.load %arg7[%c0_14, %c0_15] : memref<128x128xbf16, #tpu.memory_space<vmem>>, vector<128x128xbf16>
    %cst_16 = arith.constant dense<0.000000e+00> : vector<128x128xf32>
    %29 = tpu.matmul %27, %28, %cst_16 {dimension_numbers = #tpu.dot_dimension_numbers<[1], [0], [0], [1], [0, 0, 1, 1], [], []>} : vector<128x128xbf16>, vector<128x128xbf16>, vector<128x128xf32> -> vector<128x128xf32>
    %c0_17 = arith.constant 0 : index
    %c0_18 = arith.constant 0 : index
    %30 = vector.load %arg8[%c0_17, %c0_18] : memref<1x128xf32, #tpu.memory_space<vmem>>, vector<1x128xf32>
    %31 = vector.broadcast %30 : vector<1x128xf32> to vector<128x128xf32>
    %32 = arith.addf %29, %31 : vector<128x128xf32>
    %33 = arith.truncf %32 : vector<128x128xf32> to vector<128x128xbf16>
    %c0_19 = arith.constant 0 : index
    %c0_20 = arith.constant 0 : index
    %34 = vector.load %arg9[%c0_19, %c0_20] : memref<128x128xbf16, #tpu.memory_space<vmem>>, vector<128x128xbf16>
    tpu.vector_store %arg9[%c0_19, %c0_20], %33 {strides = array<i32>} : memref<128x128xbf16, #tpu.memory_space<vmem>>, vector<128x128xbf16>,
    return
  }
  func.func @transform_0(%arg0: i32) -> (i32, i32) {
    %c0_i32 = arith.constant 0 : i32
    %c0_i32_0 = arith.constant 0 : i32
    return %arg0, %c0_i32 : i32, i32
  }
  func.func @transform_1(%arg0: i32) -> (i32, i32) {
    %c0_i32 = arith.constant 0 : i32
    %c0_i32_0 = arith.constant 0 : i32
    return %arg0, %c0_i32 : i32, i32
  }
  func.func @transform_2(%arg0: i32) -> (i32, i32) {
    %c0_i32 = arith.constant 0 : i32
    %c0_i32_0 = arith.constant 0 : i32
    %c0_i32_1 = arith.constant 0 : i32
    return %c0_i32, %c0_i32_0 : i32, i32
  }
  func.func @transform_3(%arg0: i32) -> (i32, i32) {
    %c0_i32 = arith.constant 0 : i32
    %c0_i32_0 = arith.constant 0 : i32
    %c0_i32_1 = arith.constant 0 : i32
    return %c0_i32, %c0_i32_0 : i32, i32
  }
  func.func @transform_4(%arg0: i32) -> (i32, i32) {
    %c0_i32 = arith.constant 0 : i32
    %c0_i32_0 = arith.constant 0 : i32
    %c0_i32_1 = arith.constant 0 : i32
    return %c0_i32, %c0_i32_0 : i32, i32
  }
  func.func @transform_5(%arg0: i32) -> (i32, i32) {
    %c0_i32 = arith.constant 0 : i32
    %c0_i32_0 = arith.constant 0 : i32
    %c0_i32_1 = arith.constant 0 : i32
    return %c0_i32, %c0_i32_0 : i32, i32
  }
  func.func @transform_6(%arg0: i32) -> (i32, i32) {
    %c0_i32 = arith.constant 0 : i32
    %c0_i32_0 = arith.constant 0 : i32
    %c0_i32_1 = arith.constant 0 : i32
    return %c0_i32, %c0_i32_0 : i32, i32
  }
  func.func @transform_7(%arg0: i32) -> (i32, i32) {
    %c0_i32 = arith.constant 0 : i32
    %c0_i32_0 = arith.constant 0 : i32
    %c0_i32_1 = arith.constant 0 : i32
    return %c0_i32, %c0_i32_0 : i32, i32
  }
  func.func @transform_8(%arg0: i32) -> (i32, i32) {
    %c0_i32 = arith.constant 0 : i32
    %c0_i32_0 = arith.constant 0 : i32
    return %arg0, %c0_i32 : i32, i32
  }
}

</mosaic_0001>

<llo_original>
// kernel: tpu_custom_call.1
$region0: #{tpu_custom_call.1}
  #allocation0 [shape = 'u32[]', space=smem, size = 0x4, offset = 0x4, fixed_abs, tag = 'smem constant byte address 0x4 - core index']
  #allocation1 [shape = 'u32[144,128]{1,0:T(1,128)}', space=vmem, size = 0x12000, scoped, tag = 'internal scratch']
  %s0 = inlined_call_operand.vmem [shape: s32[128,1], index: 0, kind: input, shape index: {}]
  %s1 = inlined_call_operand.vmem [shape: s32[128,1], index: 1, kind: input, shape index: {}]
  %s2 = inlined_call_operand.vmem [shape: bf16[128,256], index: 2, kind: input, shape index: {}]
  %s3 = inlined_call_operand.vmem [shape: f32[1,256], index: 3, kind: input, shape index: {}]
  %s4 = inlined_call_operand.vmem [shape: bf16[256,128], index: 4, kind: input, shape index: {}]
  %s5 = inlined_call_operand.vmem [shape: f32[1,128], index: 5, kind: input, shape index: {}]
  %s6 = inlined_call_operand.hbm [shape: bf16[128,128], index: 6, kind: input, shape index: {}]
  %s7 = inlined_call_operand.vmem [shape: f32[1,128], index: 7, kind: input, shape index: {}]
  %s8 = inlined_call_operand.hbm [shape: bf16[128,128], index: 8, kind: output, shape index: {}]
  %s9 = sld [smem:[#allocation0]]
  $region46: #{tpu_custom_call.1} parent=0
    _
  %s11 = ssub.s32 1, %s9
  %s12 = scalar_select 0, %s11, %s9
  $region1: #{tpu_custom_call.1} parent=0
    #allocation2 [shape = 'u8[32768]{0}', space=vmem, size = 0x8000, scoped, tag = 'input window, operand 6, single buffered']
    #allocation3 [shape = 's32[1]{0}', space=sflag, size = 0x4, scoped, tag = 'scoped memory for tpu_custom_call.1']
    #allocation4 [shape = 's32[1]{0}', space=sflag, size = 0x4, scoped, tag = 'scoped memory for tpu_custom_call.1']
    #allocation5 [shape = 'u8[32768]{0}', space=vmem, size = 0x8000, scoped, tag = 'output window, operand 0, single buffered']
    %13 = vsyncpa [#allocation3], 0
    %14 = vsyncpa [#allocation4], 0
    // Predicated region
    $region2: #{tpu_custom_call.1} parent=1 // pred_check
      _
    $region3: #{tpu_custom_call.1} parent=1 // pred_check_branch
      %16 = sbr.rel (0) target = $region5
    $region4: #{tpu_custom_call.1} parent=1 // pred_region
      _
    $region5: #{tpu_custom_call.1} parent=1 // pred_fallthru
      _
    // Predicated region
    $region6: #{tpu_custom_call.1} parent=1 // pred_check
      _
    $region7: #{tpu_custom_call.1} parent=1 // pred_check_branch
      %18 = sbr.rel (0) target = $region9
    $region8: #{tpu_custom_call.1} parent=1 // pred_region
      _
    $region9: #{tpu_custom_call.1} parent=1 // pred_fallthru
      _
    // Predicated region
    $region10: #{tpu_custom_call.1} parent=1 // pred_check
      _
    $region11: #{tpu_custom_call.1} parent=1 // pred_check_branch
      %20 = sbr.rel (0) target = $region13
    $region12: #{tpu_custom_call.1} parent=1 // pred_region
      _
    $region13: #{tpu_custom_call.1} parent=1 // pred_fallthru
      _
    // Predicated region
    $region14: #{tpu_custom_call.1} parent=1 // pred_check
      _
    $region15: #{tpu_custom_call.1} parent=1 // pred_check_branch
      %22 = sbr.rel (0) target = $region17
    $region16: #{tpu_custom_call.1} parent=1 // pred_region
      _
    $region17: #{tpu_custom_call.1} parent=1 // pred_fallthru
      _
    // Predicated region
    $region18: #{tpu_custom_call.1} parent=1 // pred_check
      _
    $region19: #{tpu_custom_call.1} parent=1 // pred_check_branch
      %24 = sbr.rel (0) target = $region21
    $region20: #{tpu_custom_call.1} parent=1 // pred_region
      _
    $region21: #{tpu_custom_call.1} parent=1 // pred_fallthru
      _
    // Predicated region
    $region22: #{tpu_custom_call.1} parent=1 // pred_check
      _
    $region23: #{tpu_custom_call.1} parent=1 // pred_check_branch
      %26 = sbr.rel (0) target = $region25
    $region24: #{tpu_custom_call.1} parent=1 // pred_region
      _
    $region25: #{tpu_custom_call.1} parent=1 // pred_fallthru
      _
    // Predicated region
    $region26: #{tpu_custom_call.1} parent=1 // pred_check
      _
    $region27: #{tpu_custom_call.1} parent=1 // pred_check_branch
      %28 = sbr.rel (0) target = $region29
    $region28: #{tpu_custom_call.1} parent=1 // pred_region
      %s30 = ssub.s32 1024, 1024
      %31 = vsyncadd [#allocation3], %s30
      %s32 = sshll.u32 [#allocation2], 4
      %s33 = int_to_ptr.vmem [resolvable:$true] %s32
      %38 = dma.hbm_to_vmem [thread:$0]  %s6, 1024, %s33, [#allocation3], 64, 64, 4
    $region29: #{tpu_custom_call.1} parent=1 // pred_fallthru
      _
    // Predicated region
    $region30: #{tpu_custom_call.1} parent=1 // pred_check
      _
    $region31: #{tpu_custom_call.1} parent=1 // pred_check_branch
      %40 = sbr.rel (0) target = $region33
    $region32: #{tpu_custom_call.1} parent=1 // pred_region
      _
    $region33: #{tpu_custom_call.1} parent=1 // pred_fallthru
      _
    // Predicated region
    $region34: #{tpu_custom_call.1} parent=1 // pred_check
      _
    $region35: #{tpu_custom_call.1} parent=1 // pred_check_branch
      %42 = sbr.rel (0) target = $region37
    $region36: #{tpu_custom_call.1} parent=1 // pred_region
      %43 = dma.done [#allocation3], 1024
    $region37: #{tpu_custom_call.1} parent=1 // pred_fallthru
      _
    %v45 = vld [vmem:[%s0] sm:$0xff]
    %v46 = vld [vmem:[%s0 + $0x8] sm:$0xff]
    %v47 = vld [vmem:[%s0 + $0x10] sm:$0xff]
    %v48 = vld [vmem:[%s0 + $0x18] sm:$0xff]
    %v49 = vld [vmem:[%s0 + $0x20] sm:$0xff]
    %v50 = vld [vmem:[%s0 + $0x28] sm:$0xff]
    %v51 = vld [vmem:[%s0 + $0x30] sm:$0xff]
    %v52 = vld [vmem:[%s0 + $0x38] sm:$0xff]
    %v53 = vld [vmem:[%s0 + $0x40] sm:$0xff]
    %v54 = vld [vmem:[%s0 + $0x48] sm:$0xff]
    %v55 = vld [vmem:[%s0 + $0x50] sm:$0xff]
    %v56 = vld [vmem:[%s0 + $0x58] sm:$0xff]
    %v57 = vld [vmem:[%s0 + $0x60] sm:$0xff]
    %v58 = vld [vmem:[%s0 + $0x68] sm:$0xff]
    %v59 = vld [vmem:[%s0 + $0x70] sm:$0xff]
    %v60 = vld [vmem:[%s0 + $0x78] sm:$0xff]
    %v61 = vld [vmem:[%s1] sm:$0xff]
    %v62 = vld [vmem:[%s1 + $0x8] sm:$0xff]
    %v63 = vld [vmem:[%s1 + $0x10] sm:$0xff]
    %v64 = vld [vmem:[%s1 + $0x18] sm:$0xff]
    %v65 = vld [vmem:[%s1 + $0x20] sm:$0xff]
    %v66 = vld [vmem:[%s1 + $0x28] sm:$0xff]
    %v67 = vld [vmem:[%s1 + $0x30] sm:$0xff]
    %v68 = vld [vmem:[%s1 + $0x38] sm:$0xff]
    %v69 = vld [vmem:[%s1 + $0x40] sm:$0xff]
    %v70 = vld [vmem:[%s1 + $0x48] sm:$0xff]
    %v71 = vld [vmem:[%s1 + $0x50] sm:$0xff]
    %v72 = vld [vmem:[%s1 + $0x58] sm:$0xff]
    %v73 = vld [vmem:[%s1 + $0x60] sm:$0xff]
    %v74 = vld [vmem:[%s1 + $0x68] sm:$0xff]
    %v75 = vld [vmem:[%s1 + $0x70] sm:$0xff]
    %v76 = vld [vmem:[%s1 + $0x78] sm:$0xff]
    %vm77 = vcmp.ne.s32.totalorder %v61, 0
    %vm78 = vcmp.ne.s32.totalorder %v62, 0
    %vm79 = vcmp.ne.s32.totalorder %v63, 0
    %vm80 = vcmp.ne.s32.totalorder %v64, 0
    %vm81 = vcmp.ne.s32.totalorder %v65, 0
    %vm82 = vcmp.ne.s32.totalorder %v66, 0
    %vm83 = vcmp.ne.s32.totalorder %v67, 0
    %vm84 = vcmp.ne.s32.totalorder %v68, 0
    %vm85 = vcmp.ne.s32.totalorder %v69, 0
    %vm86 = vcmp.ne.s32.totalorder %v70, 0
    %vm87 = vcmp.ne.s32.totalorder %v71, 0
    %vm88 = vcmp.ne.s32.totalorder %v72, 0
    %vm89 = vcmp.ne.s32.totalorder %v73, 0
    %vm90 = vcmp.ne.s32.totalorder %v74, 0
    %vm91 = vcmp.ne.s32.totalorder %v75, 0
    %vm92 = vcmp.ne.s32.totalorder %v76, 0
    %v93 = vlaneseq
    %v94 = vand.u32 %v93, 127
    %95 = vset.pattern.permute.xlu0 0
    %96 = vperm.xlu0 %95, %v45
    %v97 = vpop.permute.xlu0 %96
    %98 = vset.pattern.permute.xlu0 0
    %99 = vperm.xlu0 %98, %v46
    %v100 = vpop.permute.xlu0 %99
    %101 = vset.pattern.permute.xlu0 0
    %102 = vperm.xlu0 %101, %v47
    %v103 = vpop.permute.xlu0 %102
    %104 = vset.pattern.permute.xlu0 0
    %105 = vperm.xlu0 %104, %v48
    %v106 = vpop.permute.xlu0 %105
    %107 = vset.pattern.permute.xlu0 0
    %108 = vperm.xlu0 %107, %v49
    %v109 = vpop.permute.xlu0 %108
    %110 = vset.pattern.permute.xlu0 0
    %111 = vperm.xlu0 %110, %v50
    %v112 = vpop.permute.xlu0 %111
    %113 = vset.pattern.permute.xlu0 0
    %114 = vperm.xlu0 %113, %v51
    %v115 = vpop.permute.xlu0 %114
    %116 = vset.pattern.permute.xlu0 0
    %117 = vperm.xlu0 %116, %v52
    %v118 = vpop.permute.xlu0 %117
    %119 = vset.pattern.permute.xlu0 0
    %120 = vperm.xlu0 %119, %v53
    %v121 = vpop.permute.xlu0 %120
    %122 = vset.pattern.permute.xlu0 0
    %123 = vperm.xlu0 %122, %v54
    %v124 = vpop.permute.xlu0 %123
    %125 = vset.pattern.permute.xlu0 0
    %126 = vperm.xlu0 %125, %v55
    %v127 = vpop.permute.xlu0 %126
    %128 = vset.pattern.permute.xlu0 0
    %129 = vperm.xlu0 %128, %v56
    %v130 = vpop.permute.xlu0 %129
    %131 = vset.pattern.permute.xlu0 0
    %132 = vperm.xlu0 %131, %v57
    %v133 = vpop.permute.xlu0 %132
    %134 = vset.pattern.permute.xlu0 0
    %135 = vperm.xlu0 %134, %v58
    %v136 = vpop.permute.xlu0 %135
    %137 = vset.pattern.permute.xlu0 0
    %138 = vperm.xlu0 %137, %v59
    %v139 = vpop.permute.xlu0 %138
    %140 = vset.pattern.permute.xlu0 0
    %141 = vperm.xlu0 %140, %v60
    %v142 = vpop.permute.xlu0 %141
    %vm143 = vcmp.eq.s32.totalorder %v94, %v97
    %vm144 = vcmp.eq.s32.totalorder %v94, %v100
    %vm145 = vcmp.eq.s32.totalorder %v94, %v103
    %vm146 = vcmp.eq.s32.totalorder %v94, %v106
    %vm147 = vcmp.eq.s32.totalorder %v94, %v109
    %vm148 = vcmp.eq.s32.totalorder %v94, %v112
    %vm149 = vcmp.eq.s32.totalorder %v94, %v115
    %vm150 = vcmp.eq.s32.totalorder %v94, %v118
    %vm151 = vcmp.eq.s32.totalorder %v94, %v121
    %vm152 = vcmp.eq.s32.totalorder %v94, %v124
    %vm153 = vcmp.eq.s32.totalorder %v94, %v127
    %vm154 = vcmp.eq.s32.totalorder %v94, %v130
    %vm155 = vcmp.eq.s32.totalorder %v94, %v133
    %vm156 = vcmp.eq.s32.totalorder %v94, %v136
    %vm157 = vcmp.eq.s32.totalorder %v94, %v139
    %vm158 = vcmp.eq.s32.totalorder %v94, %v142
    %v159 = vsel %vm77, 1, 0
    %v160 = vsel %vm78, 1, 0
    %v161 = vsel %vm79, 1, 0
    %v162 = vsel %vm80, 1, 0
    %v163 = vsel %vm81, 1, 0
    %v164 = vsel %vm82, 1, 0
    %v165 = vsel %vm83, 1, 0
    %v166 = vsel %vm84, 1, 0
    %v167 = vsel %vm85, 1, 0
    %v168 = vsel %vm86, 1, 0
    %v169 = vsel %vm87, 1, 0
    %v170 = vsel %vm88, 1, 0
    %v171 = vsel %vm89, 1, 0
    %v172 = vsel %vm90, 1, 0
    %v173 = vsel %vm91, 1, 0
    %v174 = vsel %vm92, 1, 0
    %175 = vset.pattern.permute.xlu0 0
    %176 = vperm.xlu0 %175, %v159
    %v177 = vpop.permute.xlu0 %176
    %178 = vset.pattern.permute.xlu0 0
    %179 = vperm.xlu0 %178, %v160
    %v180 = vpop.permute.xlu0 %179
    %181 = vset.pattern.permute.xlu0 0
    %182 = vperm.xlu0 %181, %v161
    %v183 = vpop.permute.xlu0 %182
    %184 = vset.pattern.permute.xlu0 0
    %185 = vperm.xlu0 %184, %v162
    %v186 = vpop.permute.xlu0 %185
    %187 = vset.pattern.permute.xlu0 0
    %188 = vperm.xlu0 %187, %v163
    %v189 = vpop.permute.xlu0 %188
    %190 = vset.pattern.permute.xlu0 0
    %191 = vperm.xlu0 %190, %v164
    %v192 = vpop.permute.xlu0 %191
    %193 = vset.pattern.permute.xlu0 0
    %194 = vperm.xlu0 %193, %v165
    %v195 = vpop.permute.xlu0 %194
    %196 = vset.pattern.permute.xlu0 0
    %197 = vperm.xlu0 %196, %v166
    %v198 = vpop.permute.xlu0 %197
    %199 = vset.pattern.permute.xlu0 0
    %200 = vperm.xlu0 %199, %v167
    %v201 = vpop.permute.xlu0 %200
    %202 = vset.pattern.permute.xlu0 0
    %203 = vperm.xlu0 %202, %v168
    %v204 = vpop.permute.xlu0 %203
    %205 = vset.pattern.permute.xlu0 0
    %206 = vperm.xlu0 %205, %v169
    %v207 = vpop.permute.xlu0 %206
    %208 = vset.pattern.permute.xlu0 0
    %209 = vperm.xlu0 %208, %v170
    %v210 = vpop.permute.xlu0 %209
    %211 = vset.pattern.permute.xlu0 0
    %212 = vperm.xlu0 %211, %v171
    %v213 = vpop.permute.xlu0 %212
    %214 = vset.pattern.permute.xlu0 0
    %215 = vperm.xlu0 %214, %v172
    %v216 = vpop.permute.xlu0 %215
    %217 = vset.pattern.permute.xlu0 0
    %218 = vperm.xlu0 %217, %v173
    %v219 = vpop.permute.xlu0 %218
    %220 = vset.pattern.permute.xlu0 0
    %221 = vperm.xlu0 %220, %v174
    %v222 = vpop.permute.xlu0 %221
    %vm223 = vcmp.eq.s32.totalorder %v177, 1
    %vm224 = vcmp.eq.s32.totalorder %v180, 1
    %vm225 = vcmp.eq.s32.totalorder %v183, 1
    %vm226 = vcmp.eq.s32.totalorder %v186, 1
    %vm227 = vcmp.eq.s32.totalorder %v189, 1
    %vm228 = vcmp.eq.s32.totalorder %v192, 1
    %vm229 = vcmp.eq.s32.totalorder %v195, 1
    %vm230 = vcmp.eq.s32.totalorder %v198, 1
    %vm231 = vcmp.eq.s32.totalorder %v201, 1
    %vm232 = vcmp.eq.s32.totalorder %v204, 1
    %vm233 = vcmp.eq.s32.totalorder %v207, 1
    %vm234 = vcmp.eq.s32.totalorder %v210, 1
    %vm235 = vcmp.eq.s32.totalorder %v213, 1
    %vm236 = vcmp.eq.s32.totalorder %v216, 1
    %vm237 = vcmp.eq.s32.totalorder %v219, 1
    %vm238 = vcmp.eq.s32.totalorder %v222, 1
    %vm239 = vmand %vm143, %vm223
    %vm240 = vmand %vm144, %vm224
    %vm241 = vmand %vm145, %vm225
    %vm242 = vmand %vm146, %vm226
    %vm243 = vmand %vm147, %vm227
    %vm244 = vmand %vm148, %vm228
    %vm245 = vmand %vm149, %vm229
    %vm246 = vmand %vm150, %vm230
    %vm247 = vmand %vm151, %vm231
    %vm248 = vmand %vm152, %vm232
    %vm249 = vmand %vm153, %vm233
    %vm250 = vmand %vm154, %vm234
    %vm251 = vmand %vm155, %vm235
    %vm252 = vmand %vm156, %vm236
    %vm253 = vmand %vm157, %vm237
    %vm254 = vmand %vm158, %vm238
    %v255 = vsel %vm239, 1, 0
    %v256 = vsel %vm240, 1, 0
    %v257 = vsel %vm241, 1, 0
    %v258 = vsel %vm242, 1, 0
    %v259 = vsel %vm243, 1, 0
    %v260 = vsel %vm244, 1, 0
    %v261 = vsel %vm245, 1, 0
    %v262 = vsel %vm246, 1, 0
    %v263 = vsel %vm247, 1, 0
    %v264 = vsel %vm248, 1, 0
    %v265 = vsel %vm249, 1, 0
    %v266 = vsel %vm250, 1, 0
    %v267 = vsel %vm251, 1, 0
    %v268 = vsel %vm252, 1, 0
    %v269 = vsel %vm253, 1, 0
    %v270 = vsel %vm254, 1, 0
    %v271 = vcvt.s32.f32 %v255
    %v272 = vcvt.s32.f32 %v256
    %v273 = vcvt.s32.f32 %v257
    %v274 = vcvt.s32.f32 %v258
    %v275 = vcvt.s32.f32 %v259
    %v276 = vcvt.s32.f32 %v260
    %v277 = vcvt.s32.f32 %v261
    %v278 = vcvt.s32.f32 %v262
    %v279 = vcvt.s32.f32 %v263
    %v280 = vcvt.s32.f32 %v264
    %v281 = vcvt.s32.f32 %v265
    %v282 = vcvt.s32.f32 %v266
    %v283 = vcvt.s32.f32 %v267
    %v284 = vcvt.s32.f32 %v268
    %v285 = vcvt.s32.f32 %v269
    %v286 = vcvt.s32.f32 %v270
    %v287 = vpack.c.bf16 %v272, %v271
    %v288 = vpack.c.bf16 %v274, %v273
    %v289 = vpack.c.bf16 %v276, %v275
    %v290 = vpack.c.bf16 %v278, %v277
    %v291 = vpack.c.bf16 %v280, %v279
    %v292 = vpack.c.bf16 %v282, %v281
    %v293 = vpack.c.bf16 %v284, %v283
    %v294 = vpack.c.bf16 %v286, %v285
    %v295 = vld [vmem:[%s2] sm:$0xff]
    %v296 = vld [vmem:[%s2 + $0x8] sm:$0xff]
    %v297 = vld [vmem:[%s2 + $0x10] sm:$0xff]
    %v298 = vld [vmem:[%s2 + $0x18] sm:$0xff]
    %v299 = vld [vmem:[%s2 + $0x20] sm:$0xff]
    %v300 = vld [vmem:[%s2 + $0x28] sm:$0xff]
    %v301 = vld [vmem:[%s2 + $0x30] sm:$0xff]
    %v302 = vld [vmem:[%s2 + $0x38] sm:$0xff]
    %v303 = vld [vmem:[%s2 + $0x40] sm:$0xff]
    %v304 = vld [vmem:[%s2 + $0x48] sm:$0xff]
    %v305 = vld [vmem:[%s2 + $0x50] sm:$0xff]
    %v306 = vld [vmem:[%s2 + $0x58] sm:$0xff]
    %v307 = vld [vmem:[%s2 + $0x60] sm:$0xff]
    %v308 = vld [vmem:[%s2 + $0x68] sm:$0xff]
    %v309 = vld [vmem:[%s2 + $0x70] sm:$0xff]
    %v310 = vld [vmem:[%s2 + $0x78] sm:$0xff]
    %v311 = vld [vmem:[%s3] sm:$0x3]
    %v313 = vlaneseq
    %v314 = vshrl.u32 %v313, 7
    %v315 = vsub.s32 0, %v314
    %v316 = vrot.slane %v311, %v315
    %v317 = vlaneseq
    %v318 = vshrl.u32 %v317, 7
    %v319 = vsub.s32 1, %v318
    %v320 = vrot.slane %v311, %v319
    %v339 = vunpack.c.l.b16 %v295
    %v340 = vunpack.c.h.b16 %v295
    %v341 = vunpack.c.l.b16 %v296
    %v342 = vunpack.c.h.b16 %v296
    %v343 = vunpack.c.l.b16 %v297
    %v344 = vunpack.c.h.b16 %v297
    %v345 = vunpack.c.l.b16 %v298
    %v346 = vunpack.c.h.b16 %v298
    %v347 = vunpack.c.l.b16 %v299
    %v348 = vunpack.c.h.b16 %v299
    %v349 = vunpack.c.l.b16 %v300
    %v350 = vunpack.c.h.b16 %v300
    %v351 = vunpack.c.l.b16 %v301
    %v352 = vunpack.c.h.b16 %v301
    %v353 = vunpack.c.l.b16 %v302
    %v354 = vunpack.c.h.b16 %v302
    %v355 = vunpack.c.l.b16 %v303
    %v356 = vunpack.c.h.b16 %v303
    %v357 = vunpack.c.l.b16 %v304
    %v358 = vunpack.c.h.b16 %v304
    %v359 = vunpack.c.l.b16 %v305
    %v360 = vunpack.c.h.b16 %v305
    %v361 = vunpack.c.l.b16 %v306
    %v362 = vunpack.c.h.b16 %v306
    %v363 = vunpack.c.l.b16 %v307
    %v364 = vunpack.c.h.b16 %v307
    %v365 = vunpack.c.l.b16 %v308
    %v366 = vunpack.c.h.b16 %v308
    %v367 = vunpack.c.l.b16 %v309
    %v368 = vunpack.c.h.b16 %v309
    %v369 = vunpack.c.l.b16 %v310
    %v370 = vunpack.c.h.b16 %v310
    %v371 = vpack.c.b16 %v341, %v339
    %v372 = vpack.c.b16 %v342, %v340
    %v373 = vpack.c.b16 %v345, %v343
    %v374 = vpack.c.b16 %v346, %v344
    %v375 = vpack.c.b16 %v349, %v347
    %v376 = vpack.c.b16 %v350, %v348
    %v377 = vpack.c.b16 %v353, %v351
    %v378 = vpack.c.b16 %v354, %v352
    %v379 = vpack.c.b16 %v357, %v355
    %v380 = vpack.c.b16 %v358, %v356
    %v381 = vpack.c.b16 %v361, %v359
    %v382 = vpack.c.b16 %v362, %v360
    %v383 = vpack.c.b16 %v365, %v363
    %v384 = vpack.c.b16 %v366, %v364
    %v385 = vpack.c.b16 %v369, %v367
    %v386 = vpack.c.b16 %v370, %v368
    %403 = vmatprep.subr.bf16.mxu0 %v372
    %404 = vmatpush1.bf16.msra.mxu0 %v371
    %405 = vmatprep.subr.bf16.mxu0 %v374
    %406 = vmatpush1.bf16.msra.mxu0 %v373
    %407 = vmatprep.subr.bf16.mxu0 %v376
    %408 = vmatpush1.bf16.msra.mxu0 %v375
    %409 = vmatprep.subr.bf16.mxu0 %v378
    %410 = vmatpush1.bf16.msra.mxu0 %v377
    %411 = vmatprep.subr.bf16.mxu0 %v380
    %412 = vmatpush1.bf16.msra.mxu0 %v379
    %413 = vmatprep.subr.bf16.mxu0 %v382
    %414 = vmatpush1.bf16.msra.mxu0 %v381
    %415 = vmatprep.subr.bf16.mxu0 %v384
    %416 = vmatpush1.bf16.msra.mxu0 %v383
    %417 = vmatprep.subr.bf16.mxu0 %v386
    %418 = vmatpush1.bf16.msra.mxu0 %v385
    %419 = vmatprep.subr.bf16.mxu0 0
    %420 = vmatpush1.bf16.msra.mxu0 0
    %421 = vmatprep.subr.bf16.mxu0 0
    %422 = vmatpush1.bf16.msra.mxu0 0
    %423 = vmatprep.subr.bf16.mxu0 0
    %424 = vmatpush1.bf16.msra.mxu0 0
    %425 = vmatprep.subr.bf16.mxu0 0
    %426 = vmatpush1.bf16.msra.mxu0 0
    %427 = vmatprep.subr.bf16.mxu0 0
    %428 = vmatpush1.bf16.msra.mxu0 0
    %429 = vmatprep.subr.bf16.mxu0 0
    %430 = vmatpush1.bf16.msra.mxu0 0
    %431 = vmatprep.subr.bf16.mxu0 0
    %432 = vmatpush1.bf16.msra.mxu0 0
    %433 = vmatprep.subr.bf16.mxu0 0
    %434 = vmatpush1.bf16.msra.mxu0 0
    %435 = vmatprep.mubr.bf16.mxu0 0
    %436 = vmatmul.mubr.bf16.gmra.mrb[0].mxu0 %v287
    %v437 = vpop.f32.mrb[0].mxu0
    %v438 = vadd.f32 %v316, %v437
    %v439 = vpop.f32.mrb[0].mxu0
    %v440 = vadd.f32 %v320, %v439
    %v441 = vpop.f32.mrb[0].mxu0
    %v442 = vadd.f32 %v316, %v441
    %v443 = vpop.f32.mrb[0].mxu0
    %v444 = vadd.f32 %v320, %v443
    %445 = vmatprep.mubr.bf16.mxu0 0
    %446 = vmatmul.mubr.bf16.gmra.mrb[0].mxu0 %v288
    %v447 = vpop.f32.mrb[0].mxu0
    %v448 = vadd.f32 %v316, %v447
    %v449 = vpop.f32.mrb[0].mxu0
    %v450 = vadd.f32 %v320, %v449
    %v451 = vpop.f32.mrb[0].mxu0
    %v452 = vadd.f32 %v316, %v451
    %v453 = vpop.f32.mrb[0].mxu0
    %v454 = vadd.f32 %v320, %v453
    %455 = vmatprep.mubr.bf16.mxu0 0
    %456 = vmatmul.mubr.bf16.gmra.mrb[0].mxu0 %v289
    %v457 = vpop.f32.mrb[0].mxu0
    %v458 = vadd.f32 %v316, %v457
    %v459 = vpop.f32.mrb[0].mxu0
    %v460 = vadd.f32 %v320, %v459
    %v461 = vpop.f32.mrb[0].mxu0
    %v462 = vadd.f32 %v316, %v461
    %v463 = vpop.f32.mrb[0].mxu0
    %v464 = vadd.f32 %v320, %v463
    %465 = vmatprep.mubr.bf16.mxu0 0
    %466 = vmatmul.mubr.bf16.gmra.mrb[0].mxu0 %v290
    %v467 = vpop.f32.mrb[0].mxu0
    %v468 = vadd.f32 %v316, %v467
    %v469 = vpop.f32.mrb[0].mxu0
    %v470 = vadd.f32 %v320, %v469
    %v471 = vpop.f32.mrb[0].mxu0
    %v472 = vadd.f32 %v316, %v471
    %v473 = vpop.f32.mrb[0].mxu0
    %v474 = vadd.f32 %v320, %v473
    %475 = vmatprep.mubr.bf16.mxu0 0
    %476 = vmatmul.mubr.bf16.gmra.mrb[0].mxu0 %v291
    %v477 = vpop.f32.mrb[0].mxu0
    %v478 = vadd.f32 %v316, %v477
    %v479 = vpop.f32.mrb[0].mxu0
    %v480 = vadd.f32 %v320, %v479
    %v481 = vpop.f32.mrb[0].mxu0
    %v482 = vadd.f32 %v316, %v481
    %v483 = vpop.f32.mrb[0].mxu0
    %v484 = vadd.f32 %v320, %v483
    %485 = vmatprep.mubr.bf16.mxu0 0
    %486 = vmatmul.mubr.bf16.gmra.mrb[0].mxu0 %v292
    %v487 = vpop.f32.mrb[0].mxu0
    %v488 = vadd.f32 %v316, %v487
    %v489 = vpop.f32.mrb[0].mxu0
    %v490 = vadd.f32 %v320, %v489
    %v491 = vpop.f32.mrb[0].mxu0
    %v492 = vadd.f32 %v316, %v491
    %v493 = vpop.f32.mrb[0].mxu0
    %v494 = vadd.f32 %v320, %v493
    %495 = vmatprep.mubr.bf16.mxu0 0
    %496 = vmatmul.mubr.bf16.gmra.mrb[0].mxu0 %v293
    %v497 = vpop.f32.mrb[0].mxu0
    %v498 = vadd.f32 %v316, %v497
    %v499 = vpop.f32.mrb[0].mxu0
    %v500 = vadd.f32 %v320, %v499
    %v501 = vpop.f32.mrb[0].mxu0
    %v502 = vadd.f32 %v316, %v501
    %v503 = vpop.f32.mrb[0].mxu0
    %v504 = vadd.f32 %v320, %v503
    %505 = vmatprep.mubr.bf16.mxu0 0
    %506 = vmatmul.mubr.bf16.gmra.mrb[0].mxu0 %v294
    %v507 = vpop.f32.mrb[0].mxu0
    %v508 = vadd.f32 %v316, %v507
    %v509 = vpop.f32.mrb[0].mxu0
    %v510 = vadd.f32 %v320, %v509
    %v511 = vpop.f32.mrb[0].mxu0
    %v512 = vadd.f32 %v316, %v511
    %v513 = vpop.f32.mrb[0].mxu0
    %v514 = vadd.f32 %v320, %v513
    %515 = vdwg.mxu0
    %v516 = vmax.f32 %v438, 0.0
    %v517 = vmax.f32 %v440, 0.0
    %v518 = vmax.f32 %v442, 0.0
    %v519 = vmax.f32 %v444, 0.0
    %v520 = vmax.f32 %v448, 0.0
    %v521 = vmax.f32 %v450, 0.0
    %v522 = vmax.f32 %v452, 0.0
    %v523 = vmax.f32 %v454, 0.0
    %v524 = vmax.f32 %v458, 0.0
    %v525 = vmax.f32 %v460, 0.0
    %v526 = vmax.f32 %v462, 0.0
    %v527 = vmax.f32 %v464, 0.0
    %v528 = vmax.f32 %v468, 0.0
    %v529 = vmax.f32 %v470, 0.0
    %v530 = vmax.f32 %v472, 0.0
    %v531 = vmax.f32 %v474, 0.0
    %v532 = vmax.f32 %v478, 0.0
    %v533 = vmax.f32 %v480, 0.0
    %v534 = vmax.f32 %v482, 0.0
    %v535 = vmax.f32 %v484, 0.0
    %v536 = vmax.f32 %v488, 0.0
    %v537 = vmax.f32 %v490, 0.0
    %v538 = vmax.f32 %v492, 0.0
    %v539 = vmax.f32 %v494, 0.0
    %v540 = vmax.f32 %v498, 0.0
    %v541 = vmax.f32 %v500, 0.0
    %v542 = vmax.f32 %v502, 0.0
    %v543 = vmax.f32 %v504, 0.0
    %v544 = vmax.f32 %v508, 0.0
    %v545 = vmax.f32 %v510, 0.0
    %v546 = vmax.f32 %v512, 0.0
    %v547 = vmax.f32 %v514, 0.0
    %v548 = vpack.c.bf16 %v518, %v516
    %v549 = vpack.c.bf16 %v519, %v517
    %v550 = vpack.c.bf16 %v522, %v520
    %v551 = vpack.c.bf16 %v523, %v521
    %v552 = vpack.c.bf16 %v526, %v524
    %v553 = vpack.c.bf16 %v527, %v525
    %v554 = vpack.c.bf16 %v530, %v528
    %v555 = vpack.c.bf16 %v531, %v529
    %v556 = vpack.c.bf16 %v534, %v532
    %v557 = vpack.c.bf16 %v535, %v533
    %v558 = vpack.c.bf16 %v538, %v536
    %v559 = vpack.c.bf16 %v539, %v537
    %v560 = vpack.c.bf16 %v542, %v540
    %v561 = vpack.c.bf16 %v543, %v541
    %v562 = vpack.c.bf16 %v546, %v544
    %v563 = vpack.c.bf16 %v547, %v545
    %v564 = vld [vmem:[%s4] sm:$0xf]
    %v565 = vld [vmem:[%s4 + $0x4] sm:$0xf]
    %v566 = vld [vmem:[%s4 + $0x8] sm:$0xf]
    %v567 = vld [vmem:[%s4 + $0xc] sm:$0xf]
    %v568 = vld [vmem:[%s4 + $0x10] sm:$0xf]
    %v569 = vld [vmem:[%s4 + $0x14] sm:$0xf]
    %v570 = vld [vmem:[%s4 + $0x18] sm:$0xf]
    %v571 = vld [vmem:[%s4 + $0x1c] sm:$0xf]
    %v572 = vld [vmem:[%s4 + $0x20] sm:$0xf]
    %v573 = vld [vmem:[%s4 + $0x24] sm:$0xf]
    %v574 = vld [vmem:[%s4 + $0x28] sm:$0xf]
    %v575 = vld [vmem:[%s4 + $0x2c] sm:$0xf]
    %v576 = vld [vmem:[%s4 + $0x30] sm:$0xf]
    %v577 = vld [vmem:[%s4 + $0x34] sm:$0xf]
    %v578 = vld [vmem:[%s4 + $0x38] sm:$0xf]
    %v579 = vld [vmem:[%s4 + $0x3c] sm:$0xf]
    %v580 = vld [vmem:[%s4 + $0x40] sm:$0xf]
    %v581 = vld [vmem:[%s4 + $0x44] sm:$0xf]
    %v582 = vld [vmem:[%s4 + $0x48] sm:$0xf]
    %v583 = vld [vmem:[%s4 + $0x4c] sm:$0xf]
    %v584 = vld [vmem:[%s4 + $0x50] sm:$0xf]
    %v585 = vld [vmem:[%s4 + $0x54] sm:$0xf]
    %v586 = vld [vmem:[%s4 + $0x58] sm:$0xf]
    %v587 = vld [vmem:[%s4 + $0x5c] sm:$0xf]
    %v588 = vld [vmem:[%s4 + $0x60] sm:$0xf]
    %v589 = vld [vmem:[%s4 + $0x64] sm:$0xf]
    %v590 = vld [vmem:[%s4 + $0x68] sm:$0xf]
    %v591 = vld [vmem:[%s4 + $0x6c] sm:$0xf]
    %v592 = vld [vmem:[%s4 + $0x70] sm:$0xf]
    %v593 = vld [vmem:[%s4 + $0x74] sm:$0xf]
    %v594 = vld [vmem:[%s4 + $0x78] sm:$0xf]
    %v595 = vld [vmem:[%s4 + $0x7c] sm:$0xf]
    %v596 = vld [vmem:[%s5] sm:$0x1]
    %v598 = vlaneseq
    %v599 = vshrl.u32 %v598, 7
    %v600 = vsub.s32 0, %v599
    %v601 = vrot.slane %v596, %v600
    %v635 = vunpack.c.l.b16 %v564
    %v636 = vunpack.c.l.b16 %v565
    %v637 = vunpack.c.l.b16 %v566
    %v638 = vunpack.c.l.b16 %v567
    %v639 = vunpack.c.l.b16 %v568
    %v640 = vunpack.c.l.b16 %v569
    %v641 = vunpack.c.l.b16 %v570
    %v642 = vunpack.c.l.b16 %v571
    %v643 = vunpack.c.l.b16 %v572
    %v644 = vunpack.c.l.b16 %v573
    %v645 = vunpack.c.l.b16 %v574
    %v646 = vunpack.c.l.b16 %v575
    %v647 = vunpack.c.l.b16 %v576
    %v648 = vunpack.c.l.b16 %v577
    %v649 = vunpack.c.l.b16 %v578
    %v650 = vunpack.c.l.b16 %v579
    %v651 = vunpack.c.l.b16 %v580
    %v652 = vunpack.c.l.b16 %v581
    %v653 = vunpack.c.l.b16 %v582
    %v654 = vunpack.c.l.b16 %v583
    %v655 = vunpack.c.l.b16 %v584
    %v656 = vunpack.c.l.b16 %v585
    %v657 = vunpack.c.l.b16 %v586
    %v658 = vunpack.c.l.b16 %v587
    %v659 = vunpack.c.l.b16 %v588
    %v660 = vunpack.c.l.b16 %v589
    %v661 = vunpack.c.l.b16 %v590
    %v662 = vunpack.c.l.b16 %v591
    %v663 = vunpack.c.l.b16 %v592
    %v664 = vunpack.c.l.b16 %v593
    %v665 = vunpack.c.l.b16 %v594
    %v666 = vunpack.c.l.b16 %v595
    %v667 = vpack.c.b16 %v636, %v635
    %v668 = vpack.c.b16 %v638, %v637
    %v669 = vpack.c.b16 %v640, %v639
    %v670 = vpack.c.b16 %v642, %v641
    %v671 = vpack.c.b16 %v644, %v643
    %v672 = vpack.c.b16 %v646, %v645
    %v673 = vpack.c.b16 %v648, %v647
    %v674 = vpack.c.b16 %v650, %v649
    %v675 = vpack.c.b16 %v652, %v651
    %v676 = vpack.c.b16 %v654, %v653
    %v677 = vpack.c.b16 %v656, %v655
    %v678 = vpack.c.b16 %v658, %v657
    %v679 = vpack.c.b16 %v660, %v659
    %v680 = vpack.c.b16 %v662, %v661
    %v681 = vpack.c.b16 %v664, %v663
    %v682 = vpack.c.b16 %v666, %v665
    %699 = vmatprep.subr.bf16.mxu0 0
    %700 = vmatpush1.bf16.msra.mxu0 %v667
    %701 = vmatprep.subr.bf16.mxu0 0
    %702 = vmatpush1.bf16.msra.mxu0 %v668
    %703 = vmatprep.subr.bf16.mxu0 0
    %704 = vmatpush1.bf16.msra.mxu0 %v669
    %705 = vmatprep.subr.bf16.mxu0 0
    %706 = vmatpush1.bf16.msra.mxu0 %v670
    %707 = vmatprep.subr.bf16.mxu0 0
    %708 = vmatpush1.bf16.msra.mxu0 %v671
    %709 = vmatprep.subr.bf16.mxu0 0
    %710 = vmatpush1.bf16.msra.mxu0 %v672
    %711 = vmatprep.subr.bf16.mxu0 0
    %712 = vmatpush1.bf16.msra.mxu0 %v673
    %713 = vmatprep.subr.bf16.mxu0 0
    %714 = vmatpush1.bf16.msra.mxu0 %v674
    %715 = vmatprep.subr.bf16.mxu0 0
    %716 = vmatpush1.bf16.msra.mxu0 %v675
    %717 = vmatprep.subr.bf16.mxu0 0
    %718 = vmatpush1.bf16.msra.mxu0 %v676
    %719 = vmatprep.subr.bf16.mxu0 0
    %720 = vmatpush1.bf16.msra.mxu0 %v677
    %721 = vmatprep.subr.bf16.mxu0 0
    %722 = vmatpush1.bf16.msra.mxu0 %v678
    %723 = vmatprep.subr.bf16.mxu0 0
    %724 = vmatpush1.bf16.msra.mxu0 %v679
    %725 = vmatprep.subr.bf16.mxu0 0
    %726 = vmatpush1.bf16.msra.mxu0 %v680
    %727 = vmatprep.subr.bf16.mxu0 0
    %728 = vmatpush1.bf16.msra.mxu0 %v681
    %729 = vmatprep.subr.bf16.mxu0 0
    %730 = vmatpush1.bf16.msra.mxu0 %v682
    %731 = vmatprep.mubr.bf16.mxu0 %v549
    %732 = vmatmul.mubr.bf16.gmra.mrb[0].mxu0 %v548
    %v733 = vpop.f32.mrb[0].mxu0
    %v734 = vadd.f32 %v601, %v733
    %v735 = vpop.f32.mrb[0].mxu0
    %v736 = vpop.f32.mrb[0].mxu0
    %v737 = vadd.f32 %v601, %v736
    %v738 = vpop.f32.mrb[0].mxu0
    %739 = vmatprep.mubr.bf16.mxu0 %v551
    %740 = vmatmul.mubr.bf16.gmra.mrb[0].mxu0 %v550
    %v741 = vpop.f32.mrb[0].mxu0
    %v742 = vadd.f32 %v601, %v741
    %v743 = vpop.f32.mrb[0].mxu0
    %v744 = vpop.f32.mrb[0].mxu0
    %v745 = vadd.f32 %v601, %v744
    %v746 = vpop.f32.mrb[0].mxu0
    %747 = vmatprep.mubr.bf16.mxu0 %v553
    %748 = vmatmul.mubr.bf16.gmra.mrb[0].mxu0 %v552
    %v749 = vpop.f32.mrb[0].mxu0
    %v750 = vadd.f32 %v601, %v749
    %v751 = vpop.f32.mrb[0].mxu0
    %v752 = vpop.f32.mrb[0].mxu0
    %v753 = vadd.f32 %v601, %v752
    %v754 = vpop.f32.mrb[0].mxu0
    %755 = vmatprep.mubr.bf16.mxu0 %v555
    %756 = vmatmul.mubr.bf16.gmra.mrb[0].mxu0 %v554
    %v757 = vpop.f32.mrb[0].mxu0
    %v758 = vadd.f32 %v601, %v757
    %v759 = vpop.f32.mrb[0].mxu0
    %v760 = vpop.f32.mrb[0].mxu0
    %v761 = vadd.f32 %v601, %v760
    %v762 = vpop.f32.mrb[0].mxu0
    %763 = vmatprep.mubr.bf16.mxu0 %v557
    %764 = vmatmul.mubr.bf16.gmra.mrb[0].mxu0 %v556
    %v765 = vpop.f32.mrb[0].mxu0
    %v766 = vadd.f32 %v601, %v765
    %v767 = vpop.f32.mrb[0].mxu0
    %v768 = vpop.f32.mrb[0].mxu0
    %v769 = vadd.f32 %v601, %v768
    %v770 = vpop.f32.mrb[0].mxu0
    %771 = vmatprep.mubr.bf16.mxu0 %v559
    %772 = vmatmul.mubr.bf16.gmra.mrb[0].mxu0 %v558
    %v773 = vpop.f32.mrb[0].mxu0
    %v774 = vadd.f32 %v601, %v773
    %v775 = vpop.f32.mrb[0].mxu0
    %v776 = vpop.f32.mrb[0].mxu0
    %v777 = vadd.f32 %v601, %v776
    %v778 = vpop.f32.mrb[0].mxu0
    %779 = vmatprep.mubr.bf16.mxu0 %v561
    %780 = vmatmul.mubr.bf16.gmra.mrb[0].mxu0 %v560
    %v781 = vpop.f32.mrb[0].mxu0
    %v782 = vadd.f32 %v601, %v781
    %v783 = vpop.f32.mrb[0].mxu0
    %v784 = vpop.f32.mrb[0].mxu0
    %v785 = vadd.f32 %v601, %v784
    %v786 = vpop.f32.mrb[0].mxu0
    %787 = vmatprep.mubr.bf16.mxu0 %v563
    %788 = vmatmul.mubr.bf16.gmra.mrb[0].mxu0 %v562
    %v789 = vpop.f32.mrb[0].mxu0
    %v790 = vadd.f32 %v601, %v789
    %v791 = vpop.f32.mrb[0].mxu0
    %v792 = vpop.f32.mrb[0].mxu0
    %v793 = vadd.f32 %v601, %v792
    %v794 = vpop.f32.mrb[0].mxu0
    %795 = vdwg.mxu0
    %v796 = vmax.f32 %v734, 0.0
    %v797 = vmax.f32 %v737, 0.0
    %v798 = vmax.f32 %v742, 0.0
    %v799 = vmax.f32 %v745, 0.0
    %v800 = vmax.f32 %v750, 0.0
    %v801 = vmax.f32 %v753, 0.0
    %v802 = vmax.f32 %v758, 0.0
    %v803 = vmax.f32 %v761, 0.0
    %v804 = vmax.f32 %v766, 0.0
    %v805 = vmax.f32 %v769, 0.0
    %v806 = vmax.f32 %v774, 0.0
    %v807 = vmax.f32 %v777, 0.0
    %v808 = vmax.f32 %v782, 0.0
    %v809 = vmax.f32 %v785, 0.0
    %v810 = vmax.f32 %v790, 0.0
    %v811 = vmax.f32 %v793, 0.0
    %v812 = vpack.c.bf16 %v797, %v796
    %v813 = vpack.c.bf16 %v799, %v798
    %v814 = vpack.c.bf16 %v801, %v800
    %v815 = vpack.c.bf16 %v803, %v802
    %v816 = vpack.c.bf16 %v805, %v804
    %v817 = vpack.c.bf16 %v807, %v806
    %v818 = vpack.c.bf16 %v809, %v808
    %v819 = vpack.c.bf16 %v811, %v810
    %v820 = vld [vmem:[#allocation2] sm:$0xf]
    %v821 = vld [vmem:[#allocation2 + $0x4] sm:$0xf]
    %v822 = vld [vmem:[#allocation2 + $0x8] sm:$0xf]
    %v823 = vld [vmem:[#allocation2 + $0xc] sm:$0xf]
    %v824 = vld [vmem:[#allocation2 + $0x10] sm:$0xf]
    %v825 = vld [vmem:[#allocation2 + $0x14] sm:$0xf]
    %v826 = vld [vmem:[#allocation2 + $0x18] sm:$0xf]
    %v827 = vld [vmem:[#allocation2 + $0x1c] sm:$0xf]
    %v828 = vld [vmem:[#allocation2 + $0x20] sm:$0xf]
    %v829 = vld [vmem:[#allocation2 + $0x24] sm:$0xf]
    %v830 = vld [vmem:[#allocation2 + $0x28] sm:$0xf]
    %v831 = vld [vmem:[#allocation2 + $0x2c] sm:$0xf]
    %v832 = vld [vmem:[#allocation2 + $0x30] sm:$0xf]
    %v833 = vld [vmem:[#allocation2 + $0x34] sm:$0xf]
    %v834 = vld [vmem:[#allocation2 + $0x38] sm:$0xf]
    %v835 = vld [vmem:[#allocation2 + $0x3c] sm:$0xf]
    %v836 = vld [vmem:[%s7] sm:$0x1]
    %v838 = vlaneseq
    %v839 = vshrl.u32 %v838, 7
    %v840 = vsub.s32 0, %v839
    %v841 = vrot.slane %v836, %v840
    %v859 = vunpack.c.l.b16 %v820
    %v860 = vunpack.c.l.b16 %v821
    %v861 = vunpack.c.l.b16 %v822
    %v862 = vunpack.c.l.b16 %v823
    %v863 = vunpack.c.l.b16 %v824
    %v864 = vunpack.c.l.b16 %v825
    %v865 = vunpack.c.l.b16 %v826
    %v866 = vunpack.c.l.b16 %v827
    %v867 = vunpack.c.l.b16 %v828
    %v868 = vunpack.c.l.b16 %v829
    %v869 = vunpack.c.l.b16 %v830
    %v870 = vunpack.c.l.b16 %v831
    %v871 = vunpack.c.l.b16 %v832
    %v872 = vunpack.c.l.b16 %v833
    %v873 = vunpack.c.l.b16 %v834
    %v874 = vunpack.c.l.b16 %v835
    %v875 = vpack.c.b16 %v860, %v859
    %v876 = vpack.c.b16 %v862, %v861
    %v877 = vpack.c.b16 %v864, %v863
    %v878 = vpack.c.b16 %v866, %v865
    %v879 = vpack.c.b16 %v868, %v867
    %v880 = vpack.c.b16 %v870, %v869
    %v881 = vpack.c.b16 %v872, %v871
    %v882 = vpack.c.b16 %v874, %v873
    %891 = vmatprep.subr.bf16.mxu0 0
    %892 = vmatpush1.bf16.msra.mxu0 %v875
    %893 = vmatprep.subr.bf16.mxu0 0
    %894 = vmatpush1.bf16.msra.mxu0 %v876
    %895 = vmatprep.subr.bf16.mxu0 0
    %896 = vmatpush1.bf16.msra.mxu0 %v877
    %897 = vmatprep.subr.bf16.mxu0 0
    %898 = vmatpush1.bf16.msra.mxu0 %v878
    %899 = vmatprep.subr.bf16.mxu0 0
    %900 = vmatpush1.bf16.msra.mxu0 %v879
    %901 = vmatprep.subr.bf16.mxu0 0
    %902 = vmatpush1.bf16.msra.mxu0 %v880
    %903 = vmatprep.subr.bf16.mxu0 0
    %904 = vmatpush1.bf16.msra.mxu0 %v881
    %905 = vmatprep.subr.bf16.mxu0 0
    %906 = vmatpush1.bf16.msra.mxu0 %v882
    %907 = vmatprep.subr.bf16.mxu0 0
    %908 = vmatpush1.bf16.msra.mxu0 0
    %909 = vmatprep.subr.bf16.mxu0 0
    %910 = vmatpush1.bf16.msra.mxu0 0
    %911 = vmatprep.subr.bf16.mxu0 0
    %912 = vmatpush1.bf16.msra.mxu0 0
    %913 = vmatprep.subr.bf16.mxu0 0
    %914 = vmatpush1.bf16.msra.mxu0 0
    %915 = vmatprep.subr.bf16.mxu0 0
    %916 = vmatpush1.bf16.msra.mxu0 0
    %917 = vmatprep.subr.bf16.mxu0 0
    %918 = vmatpush1.bf16.msra.mxu0 0
    %919 = vmatprep.subr.bf16.mxu0 0
    %920 = vmatpush1.bf16.msra.mxu0 0
    %921 = vmatprep.subr.bf16.mxu0 0
    %922 = vmatpush1.bf16.msra.mxu0 0
    %923 = vmatprep.mubr.bf16.mxu0 0
    %924 = vmatmul.mubr.bf16.gmra.mrb[0].mxu0 %v812
    %v925 = vpop.f32.mrb[0].mxu0
    %v926 = vadd.f32 %v841, %v925
    %v927 = vpop.f32.mrb[0].mxu0
    %v928 = vpop.f32.mrb[0].mxu0
    %v929 = vadd.f32 %v841, %v928
    %v930 = vpop.f32.mrb[0].mxu0
    %931 = vmatprep.mubr.bf16.mxu0 0
    %932 = vmatmul.mubr.bf16.gmra.mrb[0].mxu0 %v813
    %v933 = vpop.f32.mrb[0].mxu0
    %v934 = vadd.f32 %v841, %v933
    %v935 = vpop.f32.mrb[0].mxu0
    %v936 = vpop.f32.mrb[0].mxu0
    %v937 = vadd.f32 %v841, %v936
    %v938 = vpop.f32.mrb[0].mxu0
    %939 = vmatprep.mubr.bf16.mxu0 0
    %940 = vmatmul.mubr.bf16.gmra.mrb[0].mxu0 %v814
    %v941 = vpop.f32.mrb[0].mxu0
    %v942 = vadd.f32 %v841, %v941
    %v943 = vpop.f32.mrb[0].mxu0
    %v944 = vpop.f32.mrb[0].mxu0
    %v945 = vadd.f32 %v841, %v944
    %v946 = vpop.f32.mrb[0].mxu0
    %947 = vmatprep.mubr.bf16.mxu0 0
    %948 = vmatmul.mubr.bf16.gmra.mrb[0].mxu0 %v815
    %v949 = vpop.f32.mrb[0].mxu0
    %v950 = vadd.f32 %v841, %v949
    %v951 = vpop.f32.mrb[0].mxu0
    %v952 = vpop.f32.mrb[0].mxu0
    %v953 = vadd.f32 %v841, %v952
    %v954 = vpop.f32.mrb[0].mxu0
    %955 = vmatprep.mubr.bf16.mxu0 0
    %956 = vmatmul.mubr.bf16.gmra.mrb[0].mxu0 %v816
    %v957 = vpop.f32.mrb[0].mxu0
    %v958 = vadd.f32 %v841, %v957
    %v959 = vpop.f32.mrb[0].mxu0
    %v960 = vpop.f32.mrb[0].mxu0
    %v961 = vadd.f32 %v841, %v960
    %v962 = vpop.f32.mrb[0].mxu0
    %963 = vmatprep.mubr.bf16.mxu0 0
    %964 = vmatmul.mubr.bf16.gmra.mrb[0].mxu0 %v817
    %v965 = vpop.f32.mrb[0].mxu0
    %v966 = vadd.f32 %v841, %v965
    %v967 = vpop.f32.mrb[0].mxu0
    %v968 = vpop.f32.mrb[0].mxu0
    %v969 = vadd.f32 %v841, %v968
    %v970 = vpop.f32.mrb[0].mxu0
    %971 = vmatprep.mubr.bf16.mxu0 0
    %972 = vmatmul.mubr.bf16.gmra.mrb[0].mxu0 %v818
    %v973 = vpop.f32.mrb[0].mxu0
    %v974 = vadd.f32 %v841, %v973
    %v975 = vpop.f32.mrb[0].mxu0
    %v976 = vpop.f32.mrb[0].mxu0
    %v977 = vadd.f32 %v841, %v976
    %v978 = vpop.f32.mrb[0].mxu0
    %979 = vmatprep.mubr.bf16.mxu0 0
    %980 = vmatmul.mubr.bf16.gmra.mrb[0].mxu0 %v819
    %v981 = vpop.f32.mrb[0].mxu0
    %v982 = vadd.f32 %v841, %v981
    %v983 = vpop.f32.mrb[0].mxu0
    %v984 = vpop.f32.mrb[0].mxu0
    %v985 = vadd.f32 %v841, %v984
    %v986 = vpop.f32.mrb[0].mxu0
    %987 = vdwg.mxu0
    %v988 = vpack.c.bf16 %v929, %v926
    %v989 = vpack.c.bf16 %v937, %v934
    %v990 = vpack.c.bf16 %v945, %v942
    %v991 = vpack.c.bf16 %v953, %v950
    %v992 = vpack.c.bf16 %v961, %v958
    %v993 = vpack.c.bf16 %v969, %v966
    %v994 = vpack.c.bf16 %v977, %v974
    %v995 = vpack.c.bf16 %v985, %v982
    %v1004 = vunpack.c.l.b16 %v988
    %v1005 = vunpack.c.h.b16 %v988
    %v1006 = vunpack.c.l.b16 %v989
    %v1007 = vunpack.c.h.b16 %v989
    %v1008 = vunpack.c.l.b16 %v990
    %v1009 = vunpack.c.h.b16 %v990
    %v1010 = vunpack.c.l.b16 %v991
    %v1011 = vunpack.c.h.b16 %v991
    %v1012 = vunpack.c.l.b16 %v992
    %v1013 = vunpack.c.h.b16 %v992
    %v1014 = vunpack.c.l.b16 %v993
    %v1015 = vunpack.c.h.b16 %v993
    %v1016 = vunpack.c.l.b16 %v994
    %v1017 = vunpack.c.h.b16 %v994
    %v1018 = vunpack.c.l.b16 %v995
    %v1019 = vunpack.c.h.b16 %v995
    %v1020 = vpack.c.b16 %v1004, %v1004
    %v1021 = vpack.c.b16 %v1005, %v1005
    %v1022 = vpack.c.b16 %v1006, %v1006
    %v1023 = vpack.c.b16 %v1007, %v1007
    %v1024 = vpack.c.b16 %v1008, %v1008
    %v1025 = vpack.c.b16 %v1009, %v1009
    %v1026 = vpack.c.b16 %v1010, %v1010
    %v1027 = vpack.c.b16 %v1011, %v1011
    %v1028 = vpack.c.b16 %v1012, %v1012
    %v1029 = vpack.c.b16 %v1013, %v1013
    %v1030 = vpack.c.b16 %v1014, %v1014
    %v1031 = vpack.c.b16 %v1015, %v1015
    %v1032 = vpack.c.b16 %v1016, %v1016
    %v1033 = vpack.c.b16 %v1017, %v1017
    %v1034 = vpack.c.b16 %v1018, %v1018
    %v1035 = vpack.c.b16 %v1019, %v1019
    %1052 = vst [vmem:[#allocation5] sm:$0xf] %v1020
    %1053 = vst [vmem:[#allocation5 + $0x4] sm:$0xf] %v1021
    %1054 = vst [vmem:[#allocation5 + $0x8] sm:$0xf] %v1022
    %1055 = vst [vmem:[#allocation5 + $0xc] sm:$0xf] %v1023
    %1056 = vst [vmem:[#allocation5 + $0x10] sm:$0xf] %v1024
    %1057 = vst [vmem:[#allocation5 + $0x14] sm:$0xf] %v1025
    %1058 = vst [vmem:[#allocation5 + $0x18] sm:$0xf] %v1026
    %1059 = vst [vmem:[#allocation5 + $0x1c] sm:$0xf] %v1027
    %1060 = vst [vmem:[#allocation5 + $0x20] sm:$0xf] %v1028
    %1061 = vst [vmem:[#allocation5 + $0x24] sm:$0xf] %v1029
    %1062 = vst [vmem:[#allocation5 + $0x28] sm:$0xf] %v1030
    %1063 = vst [vmem:[#allocation5 + $0x2c] sm:$0xf] %v1031
    %1064 = vst [vmem:[#allocation5 + $0x30] sm:$0xf] %v1032
    %1065 = vst [vmem:[#allocation5 + $0x34] sm:$0xf] %v1033
    %1066 = vst [vmem:[#allocation5 + $0x38] sm:$0xf] %v1034
    %1067 = vst [vmem:[#allocation5 + $0x3c] sm:$0xf] %v1035
    // Predicated region
    $region38: #{tpu_custom_call.1} parent=1 // pred_check
      _
    $region39: #{tpu_custom_call.1} parent=1 // pred_check_branch
      %1069 = sbr.rel (0) target = $region41
    $region40: #{tpu_custom_call.1} parent=1 // pred_region
      %s1071 = ssub.s32 1024, 1024
      %1072 = vsyncadd [#allocation4], %s1071
      %s1073 = sshll.u32 [#allocation5], 4
      %s1074 = int_to_ptr.vmem [resolvable:$true] %s1073
      %1079 = dma.vmem_to_hbm [thread:$0]  %s1074, 1024, %s8, [#allocation4], 64, 64, 4
    $region41: #{tpu_custom_call.1} parent=1 // pred_fallthru
      _
    // Predicated region
    $region42: #{tpu_custom_call.1} parent=1 // pred_check
      _
    $region43: #{tpu_custom_call.1} parent=1 // pred_check_branch
      %1081 = sbr.rel (0) target = $region45
    $region44: #{tpu_custom_call.1} parent=1 // pred_region
      %1082 = dma.done [#allocation4], 1024
    $region45: #{tpu_custom_call.1} parent=1 // pred_fallthru
      _
    %1083 = vsyncpa [#allocation3], 1
    %1084 = vsyncpa [#allocation4], 1

</llo_original>
